<compile_context>
chip_gen: v7x
topology: tpu7x:2x2x1
jax: 0.10.0
libtpu: 0.0.40
codegen_flags: <defaults>
</compile_context>

<pallas_src>
import functools

import jax
import jax.numpy as jnp
from jax import lax
from jax.experimental import pallas as pl
from jax.experimental.pallas import tpu as pltpu

N_EMBD = 384      # n_embd in the PyTorch module
BLOCK_SIZE = 256  # max sequence length (tril buffer size) -- only T <= BLOCK_SIZE is used


def _head_kernel(x_ref, wkqv_ref, o_ref, *, scale, head_size):
    # x_ref block: (Bb, T, C); wkqv_ref: (C, 3H); o_ref block: (Bb, T, H)
    Bb, T, C = x_ref.shape
    H = head_size
    md = x_ref.dtype  # MXU operand dtype (bf16 by default); accumulation is always f32.

    # Fused QKV projection: a single (Bb*T, C) @ (C, 3H) MXU matmul.
    x2 = x_ref[...].reshape(Bb * T, C)
    kqv = jnp.dot(x2, wkqv_ref[...], preferred_element_type=jnp.float32)  # (Bb*T, 3H) f32
    kqv = kqv.reshape(Bb, T, 3 * H)

    k = kqv[:, :, 0:H]                         # (Bb, T, H) f32
    q = kqv[:, :, H:2 * H] * scale             # fold 1/sqrt(C) into q (T*H, not T*T, elems)
    v = kqv[:, :, 2 * H:3 * H]

    # Scores: contract the head dim directly -- no explicit transpose of k.
    wei = jnp.einsum('bqh,bkh->bqk', q.astype(md), k.astype(md),
                     preferred_element_type=jnp.float32)                  # (Bb, T, T) f32

    # Causal (tril) mask from 2-D (T, T) iotas, broadcast over the batch axis.
    row = lax.broadcasted_iota(jnp.int32, (T, T), 0)
    col = lax.broadcasted_iota(jnp.int32, (T, T), 1)
    mask = (col <= row)[None, :, :]                                       # (1, T, T) bool
    wei = jnp.where(mask, wei, -jnp.inf)

    # Numerically stable softmax, kept in f32 (v5e has no bf16 VPU/EUP).
    m = jnp.max(wei, axis=-1, keepdims=True)
    e = jnp.exp(wei - m)
    denom = jnp.sum(e, axis=-1, keepdims=True)     # >= 1: the diagonal is never masked.

    # dropout on the attention weights: identity (eval mode).
    # TODO(synk): training-mode dropout via pltpu.prng_seed / prng_random_bits.

    # PV matmul on the *unnormalized* probabilities; normalize the (Bb, T, H)
    # result instead of the (Bb, T, T) probabilities.  approx=True uses the
    # EUP reciprocal slot (off the VALU critical path).
    out = jnp.einsum('bqk,bkh->bqh', e.astype(md), v.astype(md),
                     preferred_element_type=jnp.float32)                  # (Bb, T, H) f32
    out = out * pl.reciprocal(denom, approx=True)
    o_ref[...] = out.astype(o_ref.dtype)


def _choose_batch_block(B, max_bb=8):
    """Largest divisor of B that is <= max_bb while keeping enough grid steps:
    >= 4 steps when B >= 4 (so each of v7x's 2 TensorCores pipelines >= 2 steps
    on the "parallel" axis), >= 2 steps when B in {2, 3}."""
    min_steps = 4 if B >= 4 else (2 if B >= 2 else 1)
    best = 1
    for bb in range(1, min(B, max_bb) + 1):
        if B % bb == 0 and B // bb >= min_steps:
            best = bb
    return best


def head_forward(x, w_key, w_query, w_value, *,
                 matmul_dtype=jnp.bfloat16, batch_block=None, max_bb=8):
    """Single self-attention head (forward, eval mode).

    x:        (B, T, C) float32, C == N_EMBD
    w_key/w_query/w_value: (C, H)  (pre-transposed nn.Linear weights)
    matmul_dtype: dtype for the MXU operands (default bf16); accumulation and
                  softmax stay in f32.  Pass jnp.float32 for exact operands.
    returns:  (B, T, H) in x's original dtype
    """
    B, T, C = x.shape
    assert C == N_EMBD
    assert T <= BLOCK_SIZE
    H = w_key.shape[1]
    out_dtype = x.dtype   # captured BEFORE any bf16 cast
    scale = C ** (-0.5)   # NOTE: PyTorch code scales by n_embd**-0.5 (C), not head_size

    # Fuse the three projections into one (C, 3H) weight -> one MXU matmul.
    wkqv = jnp.concatenate([w_key, w_query, w_value], axis=1)
    if matmul_dtype is not None:
        if x.dtype != matmul_dtype:
            x = x.astype(matmul_dtype)
        if wkqv.dtype != matmul_dtype:
            wkqv = wkqv.astype(matmul_dtype)

    Bb = batch_block or _choose_batch_block(B, max_bb=max_bb)
    assert B % Bb == 0

    kernel = functools.partial(_head_kernel, scale=scale, head_size=H)

    # Advisory cost hint so XLA schedules the wrapper-side concat/casts around us.
    cost = pl.CostEstimate(
        flops=2 * B * T * C * (3 * H) + 4 * B * T * T * H,
        transcendentals=B * T * T,
        bytes_accessed=(x.size * x.dtype.itemsize
                        + wkqv.size * wkqv.dtype.itemsize
                        + B * T * H * jnp.dtype(out_dtype).itemsize),
    )

    return pl.pallas_call(
        kernel,
        out_shape=jax.ShapeDtypeStruct((B, T, H), out_dtype),
        grid_spec=pltpu.PrefetchScalarGridSpec(
            num_scalar_prefetch=0,
            grid=(B // Bb,),
            in_specs=[
                pl.BlockSpec((Bb, T, C), lambda b: (b, 0, 0)),     # x: Bb batch elements
                pl.BlockSpec((C, 3 * H), lambda b: (0, 0)),        # fused Wk|Wq|Wv (shared)
            ],
            out_specs=pl.BlockSpec((Bb, T, H), lambda b: (b, 0, 0)),
        ),
        compiler_params=pltpu.CompilerParams(
            dimension_semantics=("parallel",)),
        cost_estimate=cost,
    )(x, wkqv)


def _reference(x, w_key, w_query, w_value):
    """Pure-JAX reference matching the PyTorch forward (eval mode)."""
    B, T, C = x.shape
    k = x @ w_key
    q = x @ w_query
    v = x @ w_value
    wei = (q @ jnp.swapaxes(k, -2, -1)) * C ** (-0.5)
    mask = jnp.tril(jnp.ones((T, T), dtype=bool))
    wei = jnp.where(mask[None, :, :], wei, -jnp.inf)
    wei = jax.nn.softmax(wei, axis=-1)
    return wei @ v


if __name__ == "__main__":
    head_size = 32
    root = jax.random.PRNGKey(0)
    key_a, key_b = jax.random.split(root)

    def make_inputs(B, T, key):
        k_x, k_wk, k_wq, k_wv = jax.random.split(key, 4)
        s = N_EMBD ** (-0.5)
        x = jax.random.normal(k_x, (B, T, N_EMBD), dtype=jnp.float32)
        wk = jax.random.normal(k_wk, (N_EMBD, head_size), dtype=jnp.float32) * s
        wq = jax.random.normal(k_wq, (N_EMBD, head_size), dtype=jnp.float32) * s
        wv = jax.random.normal(k_wv, (N_EMBD, head_size), dtype=jnp.float32) * s
        return x, wk, wq, wv

    # 1) Small run, default bf16-operand path (B=2, T=8): Bb=1, grid=(2,).
    x, wk, wq, wv = make_inputs(2, 8, key_a)
    out = jax.block_until_ready(head_forward(x, wk, wq, wv))
    ref = _reference(x, wk, wq, wv)
    assert out.shape == (2, 8, head_size)
    assert out.dtype == jnp.float32
    assert jnp.allclose(out, ref, atol=5e-2, rtol=5e-2), "bf16 (default) mismatch vs reference"

    # 2) Batch-blocked default path (B=8, T=32): Bb=2, grid=(4,) -> exercises Bb>1
    #    and the >=4-grid-steps rule for v7x's two TensorCores.
    x2, wk2, wq2, wv2 = make_inputs(8, 32, key_b)
    out2 = jax.block_until_ready(head_forward(x2, wk2, wq2, wv2))
    ref2 = _reference(x2, wk2, wq2, wv2)
    assert out2.shape == (8, 32, head_size)
    assert jnp.allclose(out2, ref2, atol=5e-2, rtol=5e-2), "batched bf16 mismatch vs reference"

    # 3) Exact f32-operand path (tight tolerance; only approximation is the EUP reciprocal).
    out3 = jax.block_until_ready(
        head_forward(x2, wk2, wq2, wv2, matmul_dtype=jnp.float32))
    assert out3.shape == (8, 32, head_size)
    assert jnp.allclose(out3, ref2, atol=2e-2, rtol=2e-2), "f32 mismatch vs reference"

    print("KERNEL_OK")
</pallas_src>

<mosaic_0001>
module attributes {stable_mosaic.version = 11 : i64} {
  func.func @_head_kernel(%arg0: i32, %arg1: memref<1x8x384xbf16, #tpu.memory_space<vmem>>, %arg2: memref<384x96xbf16, #tpu.memory_space<vmem>>, %arg3: memref<1x8x32xf32, #tpu.memory_space<vmem>>) attributes {dimension_semantics = [#tpu.dimension_semantics<parallel>], iteration_bounds = array<i64: 2>, scalar_prefetch = 0 : i64, scratch_operands = 0 : i64, tpu.core_type = #tpu.core_type<tc>, window_params = [{transform_indices = @transform_0, window_bounds = array<i64: 1, 8, 384>}, {pipeline_mode = #tpu.pipeline_mode<synchronous>, transform_indices = @transform_1, window_bounds = array<i64: 384, 96>}, {transform_indices = @transform_2, window_bounds = array<i64: 1, 8, 32>}]} {
    %c0 = arith.constant 0 : index
    %c0_0 = arith.constant 0 : index
    %c0_1 = arith.constant 0 : index
    %0 = vector.load %arg1[%c0, %c0_0, %c0_1] : memref<1x8x384xbf16, #tpu.memory_space<vmem>>, vector<1x8x384xbf16>
    %1 = vector.shape_cast %0 : vector<1x8x384xbf16> to vector<8x384xbf16>
    %c0_2 = arith.constant 0 : index
    %c0_3 = arith.constant 0 : index
    %2 = vector.load %arg2[%c0_2, %c0_3] : memref<384x96xbf16, #tpu.memory_space<vmem>>, vector<384x96xbf16>
    %cst = arith.constant dense<0.000000e+00> : vector<8x96xf32>
    %3 = tpu.matmul %1, %2, %cst {dimension_numbers = #tpu.dot_dimension_numbers<[1], [0], [0], [1], [0, 0, 1, 1], [], []>} : vector<8x384xbf16>, vector<384x96xbf16>, vector<8x96xf32> -> vector<8x96xf32>
    %4 = vector.shape_cast %3 : vector<8x96xf32> to vector<1x8x96xf32>
    %5 = vector.extract_strided_slice %4 {offsets = [0, 0, 0], sizes = [1, 8, 32], strides = [1, 1, 1]} : vector<1x8x96xf32> to vector<1x8x32xf32>
    %6 = vector.extract_strided_slice %4 {offsets = [0, 0, 32], sizes = [1, 8, 32], strides = [1, 1, 1]} : vector<1x8x96xf32> to vector<1x8x32xf32>
    %cst_4 = arith.constant 0.0510310382 : f32
    %7 = vector.broadcast %cst_4 : f32 to vector<1x8x32xf32>
    %8 = arith.mulf %6, %7 : vector<1x8x32xf32>
    %9 = vector.extract_strided_slice %4 {offsets = [0, 0, 64], sizes = [1, 8, 32], strides = [1, 1, 1]} : vector<1x8x96xf32> to vector<1x8x32xf32>
    %10 = arith.truncf %8 : vector<1x8x32xf32> to vector<1x8x32xbf16>
    %11 = arith.truncf %5 : vector<1x8x32xf32> to vector<1x8x32xbf16>
    "tpu.trace_start"() <{level = 10 : i32, message = "bqh,bkh->bqk"}> : () -> ()
    %cst_5 = arith.constant dense<0.000000e+00> : vector<1x8x8xf32>
    %12 = tpu.matmul %10, %11, %cst_5 {dimension_numbers = #tpu.dot_dimension_numbers<[2], [2], [1], [1], [0, 0, 0, 1, 1, 1], [0], [0]>} : vector<1x8x32xbf16>, vector<1x8x32xbf16>, vector<1x8x8xf32> -> vector<1x8x8xf32>
    "tpu.trace_stop"() : () -> ()
    %13 = tpu.iota {dimensions = array<i32: 0>} : vector<8x8xi32>
    %14 = tpu.iota {dimensions = array<i32: 1>} : vector<8x8xi32>
    %15 = arith.cmpi sle, %14, %13 : vector<8x8xi32>
    %16 = vector.shape_cast %15 : vector<8x8xi1> to vector<1x8x8xi1>
    %cst_6 = arith.constant 0xFF800000 : f32
    %17 = vector.broadcast %cst_6 : f32 to vector<1x8x8xf32>
    %18 = arith.select %16, %12, %17 : vector<1x8x8xi1>, vector<1x8x8xf32>
    %cst_7 = arith.constant dense<0xFF800000> : vector<1x8xf32>
    %19 = vector.multi_reduction <maximumf>, %18, %cst_7 [2] : vector<1x8x8xf32> to vector<1x8xf32>
    %20 = vector.shape_cast %19 : vector<1x8xf32> to vector<1x8x1xf32>
    %21 = vector.broadcast %20 : vector<1x8x1xf32> to vector<1x8x8xf32>
    %22 = arith.subf %18, %21 : vector<1x8x8xf32>
    %23 = math.exp %22 : vector<1x8x8xf32>
    %cst_8 = arith.constant dense<0.000000e+00> : vector<1x8xf32>
    %24 = vector.multi_reduction <add>, %23, %cst_8 [2] : vector<1x8x8xf32> to vector<1x8xf32>
    %25 = vector.shape_cast %24 : vector<1x8xf32> to vector<1x8x1xf32>
    %26 = arith.truncf %23 : vector<1x8x8xf32> to vector<1x8x8xbf16>
    %27 = arith.truncf %9 : vector<1x8x32xf32> to vector<1x8x32xbf16>
    "tpu.trace_start"() <{level = 10 : i32, message = "bqk,bkh->bqh"}> : () -> ()
    %cst_9 = arith.constant dense<0.000000e+00> : vector<1x8x32xf32>
    %28 = tpu.matmul %26, %27, %cst_9 {dimension_numbers = #tpu.dot_dimension_numbers<[2], [1], [1], [2], [0, 0, 0, 1, 1, 2], [0], [0]>} : vector<1x8x8xbf16>, vector<1x8x32xbf16>, vector<1x8x32xf32> -> vector<1x8x32xf32>
    "tpu.trace_stop"() : () -> ()
    %29 = tpu.reciprocal %25 {approx = true} : vector<1x8x1xf32> -> vector<1x8x1xf32>
    %30 = vector.broadcast %29 : vector<1x8x1xf32> to vector<1x8x32xf32>
    %31 = arith.mulf %28, %30 : vector<1x8x32xf32>
    %c0_10 = arith.constant 0 : index
    %c0_11 = arith.constant 0 : index
    %c0_12 = arith.constant 0 : index
    %32 = vector.load %arg3[%c0_10, %c0_11, %c0_12] : memref<1x8x32xf32, #tpu.memory_space<vmem>>, vector<1x8x32xf32>
    tpu.vector_store %arg3[%c0_10, %c0_11, %c0_12], %31 {strides = array<i32>} : memref<1x8x32xf32, #tpu.memory_space<vmem>>, vector<1x8x32xf32>,
    return
  }
  func.func @transform_0(%arg0: i32) -> (i32, i32, i32) {
    %c0_i32 = arith.constant 0 : i32
    %c0_i32_0 = arith.constant 0 : i32
    %c0_i32_1 = arith.constant 0 : i32
    return %arg0, %c0_i32, %c0_i32_0 : i32, i32, i32
  }
  func.func @transform_1(%arg0: i32) -> (i32, i32) {
    %c0_i32 = arith.constant 0 : i32
    %c0_i32_0 = arith.constant 0 : i32
    %c0_i32_1 = arith.constant 0 : i32
    return %c0_i32, %c0_i32_0 : i32, i32
  }
  func.func @transform_2(%arg0: i32) -> (i32, i32, i32) {
    %c0_i32 = arith.constant 0 : i32
    %c0_i32_0 = arith.constant 0 : i32
    %c0_i32_1 = arith.constant 0 : i32
    return %arg0, %c0_i32, %c0_i32_0 : i32, i32, i32
  }
}

</mosaic_0001>

<llo_original>
// kernel: tpu_custom_call.1
$region0: #{tpu_custom_call.1}
  #allocation0 [shape = 'u32[]', space=smem, size = 0x4, offset = 0x4, fixed_abs, tag = 'smem constant byte address 0x4 - core index']
  #allocation1 [shape = 'u32[144,128]{1,0:T(1,128)}', space=vmem, size = 0x12000, scoped, tag = 'internal scratch']
  %s0 = inlined_call_operand.vmem [shape: bf16[2,8,384], index: 0, kind: input, shape index: {}]
  %s1 = inlined_call_operand.vmem [shape: bf16[384,96], index: 1, kind: input, shape index: {}]
  %s2 = inlined_call_operand.hbm [shape: f32[2,8,32], index: 2, kind: output, shape index: {}]
  %s3 = sld [smem:[#allocation0]]
  $region41: #{tpu_custom_call.1} parent=0
    _
  %s5 = ssub.s32 1, %s3
  %s6 = scalar_select 0, %s5, %s3
  $region1: #{tpu_custom_call.1} parent=0
    #allocation2 [shape = 'u8[8192]{0}', space=vmem, size = 0x2000, scoped, tag = 'output window, operand 0']
    #allocation3 [shape = 's32[2]{0}', space=sflag, size = 0x8, scoped, tag = 'scoped memory for tpu_custom_call.1']
    %7 = vsyncpa [#allocation3], 0
    %s8 = scalar_lea.sflag [#allocation3], 1
    %9 = vsyncpa %s8, 0
    loop: start=0, step=1, limit=4
    $region2: #{tpu_custom_call.1} parent=1 // loop_pre_header
      _
    $region3: #{tpu_custom_call.1} parent=1 // loop_header
      %s11 = sphi 0, %s15
      %p12 = scmp.ge.s32.totalorder %s11, 4
      %s21 = sphi 0, %s23
      %s24 = sphi 0, %s21
      %s25 = sphi 0, %s24
      %s41 = sphi 0, %s25
      %s45 = sphi 0, %s45
      %s47 = sphi 0, %s45
      %s48 = sphi 0, %s47
      %s62 = sphi 0, %s48
      %s68 = sphi 0, %s70
      %s71 = sphi 0, %s68
      %s72 = sphi 0, %s71
      %s88 = sphi 0, %s72
    $region4: #{tpu_custom_call.1} parent=1 // loop_header_branch
      %14 = sbr.rel (%p12) target = $region8
    $region5: #{tpu_custom_call.1} parent=1 // loop_body
      %s16 = ssub.s32 %s11, 1
      %s17 = ssub.s32 %s11, 2
      %s18 = sadd.s32 %s11, 1
      %s19 = ssub.s32 %s11, %s18
      %p20 = scmp.eq.s32.totalorder %s19, 0
      %s22 = sadd.s32 %s21, 1
      %s23 = scalar_select %p20, %s21, %s22
      %p26 = pneg %p20
      %p27 = scmp.eq.s32.totalorder %s11, 1
      %p28 = por %p26, %p27
      %p29 = scmp.ne.s32.totalorder %s21, %s24
      %p30 = scmp.eq.s32.totalorder %s11, 0
      %p31 = por %p29, %p30
      %p32 = scmp.ne.s32.totalorder %s21, %s24
      %p33 = scmp.eq.s32.totalorder %s16, 1
      %p34 = por %p32, %p33
      %p35 = scmp.ne.s32.totalorder %s24, %s25
      %p36 = scmp.eq.s32.totalorder %s16, 0
      %p37 = por %p35, %p36
      %p38 = scmp.ne.s32.totalorder %s24, %s25
      %p39 = scmp.eq.s32.totalorder %s17, 1
      %p40 = por %p38, %p39
      %p42 = scmp.ne.s32.totalorder %s25, %s41
      %p43 = scmp.eq.s32.totalorder %s17, 0
      %p44 = por %p42, %p43
      %s46 = sadd.s32 %s45, 1
      %p49 = scmp.eq.s32.totalorder %s11, 1
      %p50 = scmp.ne.s32.totalorder %s45, %s47
      %p51 = scmp.eq.s32.totalorder %s11, 0
      %p52 = por %p50, %p51
      %p53 = scmp.ne.s32.totalorder %s45, %s47
      %p54 = scmp.eq.s32.totalorder %s16, 1
      %p55 = por %p53, %p54
      %p56 = scmp.ne.s32.totalorder %s47, %s48
      %p57 = scmp.eq.s32.totalorder %s16, 0
      %p58 = por %p56, %p57
      %p59 = scmp.ne.s32.totalorder %s47, %s48
      %p60 = scmp.eq.s32.totalorder %s17, 1
      %p61 = por %p59, %p60
      %p63 = scmp.ne.s32.totalorder %s48, %s62
      %p64 = scmp.eq.s32.totalorder %s17, 0
      %p65 = por %p63, %p64
      %s66 = ssub.s32 %s11, %s18
      %p67 = scmp.eq.s32.totalorder %s66, 0
      %s69 = sadd.s32 %s68, 1
      %s70 = scalar_select %p67, %s68, %s69
      %p73 = pneg %p67
      %p74 = scmp.eq.s32.totalorder %s11, 1
      %p75 = por %p73, %p74
      %p76 = scmp.ne.s32.totalorder %s68, %s71
      %p77 = scmp.eq.s32.totalorder %s11, 0
      %p78 = por %p76, %p77
      %p79 = scmp.ne.s32.totalorder %s68, %s71
      %p80 = scmp.eq.s32.totalorder %s16, 1
      %p81 = por %p79, %p80
      %p82 = scmp.ne.s32.totalorder %s71, %s72
      %p83 = scmp.eq.s32.totalorder %s16, 0
      %p84 = por %p82, %p83
      %p85 = scmp.ne.s32.totalorder %s71, %s72
      %p86 = scmp.eq.s32.totalorder %s17, 1
      %p87 = por %p85, %p86
      %p89 = scmp.ne.s32.totalorder %s72, %s88
      %p90 = scmp.eq.s32.totalorder %s17, 0
      %p91 = por %p89, %p90
      %p92 = scmp.le.s32.totalorder 1, %s11
      %p93 = scmp.lt.s32.totalorder %s11, 3
      %p94 = pnand %p92, %p93
      %p95 = pneg %p94
      // Predicated region
      $region9: #{tpu_custom_call.1} parent=5 // pred_check
        _
      $region10: #{tpu_custom_call.1} parent=5 // pred_check_branch
        %97 = sbr.rel (%p94) target = $region12
      $region11: #{tpu_custom_call.1} parent=5 // pred_region
        %s98 = ssub.s32 %s11, 1
        // Predicated region
        $region13: #{tpu_custom_call.1} parent=11 // pred_check
          %p99 = pneg %p58
        $region14: #{tpu_custom_call.1} parent=11 // pred_check_branch
          %101 = sbr.rel (%p99) target = $region16
        $region15: #{tpu_custom_call.1} parent=11 // pred_region
          _
        $region16: #{tpu_custom_call.1} parent=11 // pred_fallthru
          _
      $region12: #{tpu_custom_call.1} parent=5 // pred_fallthru
        _
      %p102 = scmp.lt.s32.totalorder %s11, 2
      // Predicated region
      $region17: #{tpu_custom_call.1} parent=5 // pred_check
        %p103 = pneg %p102
      $region18: #{tpu_custom_call.1} parent=5 // pred_check_branch
        %105 = sbr.rel (%p103) target = $region20
      $region19: #{tpu_custom_call.1} parent=5 // pred_region
        // Predicated region
        $region21: #{tpu_custom_call.1} parent=19 // pred_check
          %p106 = pneg %p31
        $region22: #{tpu_custom_call.1} parent=19 // pred_check_branch
          %108 = sbr.rel (%p106) target = $region24
        $region23: #{tpu_custom_call.1} parent=19 // pred_region
          %p109 = scmp.lt.s32.totalorder %s11, 1
          %s110 = scalar_select %p109, %s11, 1
          %s111 = smul.addr %s110, 3
          %s112 = smul.addr %s111, 4
          %s113 = scalar_lea.vmem %s0, %s112
        $region24: #{tpu_custom_call.1} parent=19 // pred_fallthru
          _
      $region20: #{tpu_custom_call.1} parent=5 // pred_fallthru
        _
      %p114 = scmp.le.s32.totalorder 1, %s11
      %p115 = scmp.lt.s32.totalorder %s11, 3
      %p116 = pnand %p114, %p115
      %p117 = pneg %p116
      // Predicated region
      $region25: #{tpu_custom_call.1} parent=5 // pred_check
        _
      $region26: #{tpu_custom_call.1} parent=5 // pred_check_branch
        %119 = sbr.rel (%p116) target = $region28
      $region27: #{tpu_custom_call.1} parent=5 // pred_region
        %s120 = ssub.s32 %s11, 1
        %p121 = scmp.lt.s32.totalorder %s16, 1
        %s122 = scalar_select %p121, %s16, 1
        %s123 = smul.addr %s122, 3
        %s124 = smul.addr %s123, 4
        %s125 = scalar_lea.vmem %s0, %s124
        %p126 = pneg %p37
        %p127 = pneg %p34
        %p128 = pneg %p58
        %p129 = pneg %p55
        %p130 = pneg %p84
        %p131 = pneg %p81
        %s132 = sand.u32 %s71, 1
        %s133 = scalar_lea.sflag [#allocation3], %s132
        %s134 = sand.u32 %s71, 1
        %s135 = smul.addr %s134, 8
        %s136 = scalar_lea.vmem [#allocation2], %s135
        %p137 = scmp.lt.s32.totalorder %s16, 1
        %s138 = scalar_select %p137, %s16, 1
        %s139 = smul.addr %s138, 3
        %s140 = smul.addr %s139, 4
        %s141 = scalar_lea.vmem %s0, %s140
        %v143 = vld [vmem:[%s141] sm:$0xff]
        %v144 = vld [vmem:[%s141 + $0x8] sm:$0xf]
        %v145 = vld [vmem:[%s1] sm:$0xf]
        %v146 = vld [vmem:[%s1 + $0x4] sm:$0xf]
        %v147 = vld [vmem:[%s1 + $0x8] sm:$0xf]
        %v148 = vld [vmem:[%s1 + $0xc] sm:$0xf]
        %v149 = vld [vmem:[%s1 + $0x10] sm:$0xf]
        %v150 = vld [vmem:[%s1 + $0x14] sm:$0xf]
        %v151 = vld [vmem:[%s1 + $0x18] sm:$0xf]
        %v152 = vld [vmem:[%s1 + $0x1c] sm:$0xf]
        %v153 = vld [vmem:[%s1 + $0x20] sm:$0xf]
        %v154 = vld [vmem:[%s1 + $0x24] sm:$0xf]
        %v155 = vld [vmem:[%s1 + $0x28] sm:$0xf]
        %v156 = vld [vmem:[%s1 + $0x2c] sm:$0xf]
        %v157 = vld [vmem:[%s1 + $0x30] sm:$0xf]
        %v158 = vld [vmem:[%s1 + $0x34] sm:$0xf]
        %v159 = vld [vmem:[%s1 + $0x38] sm:$0xf]
        %v160 = vld [vmem:[%s1 + $0x3c] sm:$0xf]
        %v161 = vld [vmem:[%s1 + $0x40] sm:$0xf]
        %v162 = vld [vmem:[%s1 + $0x44] sm:$0xf]
        %v163 = vld [vmem:[%s1 + $0x48] sm:$0xf]
        %v164 = vld [vmem:[%s1 + $0x4c] sm:$0xf]
        %v165 = vld [vmem:[%s1 + $0x50] sm:$0xf]
        %v166 = vld [vmem:[%s1 + $0x54] sm:$0xf]
        %v167 = vld [vmem:[%s1 + $0x58] sm:$0xf]
        %v168 = vld [vmem:[%s1 + $0x5c] sm:$0xf]
        %v169 = vld [vmem:[%s1 + $0x60] sm:$0xf]
        %v170 = vld [vmem:[%s1 + $0x64] sm:$0xf]
        %v171 = vld [vmem:[%s1 + $0x68] sm:$0xf]
        %v172 = vld [vmem:[%s1 + $0x6c] sm:$0xf]
        %v173 = vld [vmem:[%s1 + $0x70] sm:$0xf]
        %v174 = vld [vmem:[%s1 + $0x74] sm:$0xf]
        %v175 = vld [vmem:[%s1 + $0x78] sm:$0xf]
        %v176 = vld [vmem:[%s1 + $0x7c] sm:$0xf]
        %v177 = vld [vmem:[%s1 + $0x80] sm:$0xf]
        %v178 = vld [vmem:[%s1 + $0x84] sm:$0xf]
        %v179 = vld [vmem:[%s1 + $0x88] sm:$0xf]
        %v180 = vld [vmem:[%s1 + $0x8c] sm:$0xf]
        %v181 = vld [vmem:[%s1 + $0x90] sm:$0xf]
        %v182 = vld [vmem:[%s1 + $0x94] sm:$0xf]
        %v183 = vld [vmem:[%s1 + $0x98] sm:$0xf]
        %v184 = vld [vmem:[%s1 + $0x9c] sm:$0xf]
        %v185 = vld [vmem:[%s1 + $0xa0] sm:$0xf]
        %v186 = vld [vmem:[%s1 + $0xa4] sm:$0xf]
        %v187 = vld [vmem:[%s1 + $0xa8] sm:$0xf]
        %v188 = vld [vmem:[%s1 + $0xac] sm:$0xf]
        %v189 = vld [vmem:[%s1 + $0xb0] sm:$0xf]
        %v190 = vld [vmem:[%s1 + $0xb4] sm:$0xf]
        %v191 = vld [vmem:[%s1 + $0xb8] sm:$0xf]
        %v192 = vld [vmem:[%s1 + $0xbc] sm:$0xf]
        %v195 = vunpack.c.l.b16 %v143
        %v196 = vunpack.c.h.b16 %v143
        %v197 = vunpack.c.l.b16 %v144
        %v198 = vpack.c.b16 %v195, %v195
        %v199 = vpack.c.b16 %v196, %v196
        %v200 = vpack.c.b16 %v197, %v197
        %v252 = vunpack.c.l.b16 %v145
        %v253 = vunpack.c.l.b16 %v146
        %v254 = vunpack.c.l.b16 %v147
        %v255 = vunpack.c.l.b16 %v148
        %v256 = vunpack.c.l.b16 %v149
        %v257 = vunpack.c.l.b16 %v150
        %v258 = vunpack.c.l.b16 %v151
        %v259 = vunpack.c.l.b16 %v152
        %v260 = vunpack.c.l.b16 %v153
        %v261 = vunpack.c.l.b16 %v154
        %v262 = vunpack.c.l.b16 %v155
        %v263 = vunpack.c.l.b16 %v156
        %v264 = vunpack.c.l.b16 %v157
        %v265 = vunpack.c.l.b16 %v158
        %v266 = vunpack.c.l.b16 %v159
        %v267 = vunpack.c.l.b16 %v160
        %v268 = vunpack.c.l.b16 %v161
        %v269 = vunpack.c.l.b16 %v162
        %v270 = vunpack.c.l.b16 %v163
        %v271 = vunpack.c.l.b16 %v164
        %v272 = vunpack.c.l.b16 %v165
        %v273 = vunpack.c.l.b16 %v166
        %v274 = vunpack.c.l.b16 %v167
        %v275 = vunpack.c.l.b16 %v168
        %v276 = vunpack.c.l.b16 %v169
        %v277 = vunpack.c.l.b16 %v170
        %v278 = vunpack.c.l.b16 %v171
        %v279 = vunpack.c.l.b16 %v172
        %v280 = vunpack.c.l.b16 %v173
        %v281 = vunpack.c.l.b16 %v174
        %v282 = vunpack.c.l.b16 %v175
        %v283 = vunpack.c.l.b16 %v176
        %v284 = vunpack.c.l.b16 %v177
        %v285 = vunpack.c.l.b16 %v178
        %v286 = vunpack.c.l.b16 %v179
        %v287 = vunpack.c.l.b16 %v180
        %v288 = vunpack.c.l.b16 %v181
        %v289 = vunpack.c.l.b16 %v182
        %v290 = vunpack.c.l.b16 %v183
        %v291 = vunpack.c.l.b16 %v184
        %v292 = vunpack.c.l.b16 %v185
        %v293 = vunpack.c.l.b16 %v186
        %v294 = vunpack.c.l.b16 %v187
        %v295 = vunpack.c.l.b16 %v188
        %v296 = vunpack.c.l.b16 %v189
        %v297 = vunpack.c.l.b16 %v190
        %v298 = vunpack.c.l.b16 %v191
        %v299 = vunpack.c.l.b16 %v192
        %v300 = vpack.c.b16 %v253, %v252
        %v301 = vpack.c.b16 %v255, %v254
        %v302 = vpack.c.b16 %v257, %v256
        %v303 = vpack.c.b16 %v259, %v258
        %v304 = vpack.c.b16 %v261, %v260
        %v305 = vpack.c.b16 %v263, %v262
        %v306 = vpack.c.b16 %v265, %v264
        %v307 = vpack.c.b16 %v267, %v266
        %v308 = vpack.c.b16 %v269, %v268
        %v309 = vpack.c.b16 %v271, %v270
        %v310 = vpack.c.b16 %v273, %v272
        %v311 = vpack.c.b16 %v275, %v274
        %v312 = vpack.c.b16 %v277, %v276
        %v313 = vpack.c.b16 %v279, %v278
        %v314 = vpack.c.b16 %v281, %v280
        %v315 = vpack.c.b16 %v283, %v282
        %v316 = vpack.c.b16 %v285, %v284
        %v317 = vpack.c.b16 %v287, %v286
        %v318 = vpack.c.b16 %v289, %v288
        %v319 = vpack.c.b16 %v291, %v290
        %v320 = vpack.c.b16 %v293, %v292
        %v321 = vpack.c.b16 %v295, %v294
        %v322 = vpack.c.b16 %v297, %v296
        %v323 = vpack.c.b16 %v299, %v298
        %348 = vmatprep.subr.bf16.mxu0 0
        %349 = vmatpush1.bf16.msra.mxu0 %v300
        %350 = vmatprep.subr.bf16.mxu0 0
        %351 = vmatpush1.bf16.msra.mxu0 %v301
        %352 = vmatprep.subr.bf16.mxu0 0
        %353 = vmatpush1.bf16.msra.mxu0 %v302
        %354 = vmatprep.subr.bf16.mxu0 0
        %355 = vmatpush1.bf16.msra.mxu0 %v303
        %356 = vmatprep.subr.bf16.mxu0 0
        %357 = vmatpush1.bf16.msra.mxu0 %v304
        %358 = vmatprep.subr.bf16.mxu0 0
        %359 = vmatpush1.bf16.msra.mxu0 %v305
        %360 = vmatprep.subr.bf16.mxu0 0
        %361 = vmatpush1.bf16.msra.mxu0 %v306
        %362 = vmatprep.subr.bf16.mxu0 0
        %363 = vmatpush1.bf16.msra.mxu0 %v307
        %364 = vmatprep.subr.bf16.mxu0 0
        %365 = vmatpush1.bf16.msra.mxu0 %v308
        %366 = vmatprep.subr.bf16.mxu0 0
        %367 = vmatpush1.bf16.msra.mxu0 %v309
        %368 = vmatprep.subr.bf16.mxu0 0
        %369 = vmatpush1.bf16.msra.mxu0 %v310
        %370 = vmatprep.subr.bf16.mxu0 0
        %371 = vmatpush1.bf16.msra.mxu0 %v311
        %372 = vmatprep.subr.bf16.mxu0 0
        %373 = vmatpush1.bf16.msra.mxu0 %v312
        %374 = vmatprep.subr.bf16.mxu0 0
        %375 = vmatpush1.bf16.msra.mxu0 %v313
        %376 = vmatprep.subr.bf16.mxu0 0
        %377 = vmatpush1.bf16.msra.mxu0 %v314
        %378 = vmatprep.subr.bf16.mxu0 0
        %379 = vmatpush1.bf16.msra.mxu0 %v315
        %380 = vmatprep.mubr.bf16.mxu0 %v199
        %381 = vmatmul.mubr.bf16.gmra.mrb[0].mxu0 %v198
        %v382 = vpop.f32.mrb[0].mxu0
        %v383 = vadd.f32 0.0, %v382
        %v384 = vpop.f32.mrb[0].mxu0
        %v385 = vpop.f32.mrb[0].mxu0
        %v386 = vpop.f32.mrb[0].mxu0
        %387 = vdwg.mxu0
        %388 = vmatprep.subr.bf16.mxu0 0
        %389 = vmatpush1.bf16.msra.mxu0 %v316
        %390 = vmatprep.subr.bf16.mxu0 0
        %391 = vmatpush1.bf16.msra.mxu0 %v317
        %392 = vmatprep.subr.bf16.mxu0 0
        %393 = vmatpush1.bf16.msra.mxu0 %v318
        %394 = vmatprep.subr.bf16.mxu0 0
        %395 = vmatpush1.bf16.msra.mxu0 %v319
        %396 = vmatprep.subr.bf16.mxu0 0
        %397 = vmatpush1.bf16.msra.mxu0 %v320
        %398 = vmatprep.subr.bf16.mxu0 0
        %399 = vmatpush1.bf16.msra.mxu0 %v321
        %400 = vmatprep.subr.bf16.mxu0 0
        %401 = vmatpush1.bf16.msra.mxu0 %v322
        %402 = vmatprep.subr.bf16.mxu0 0
        %403 = vmatpush1.bf16.msra.mxu0 %v323
        %404 = vmatprep.subr.bf16.mxu0 0
        %405 = vmatpush1.bf16.msra.mxu0 0
        %406 = vmatprep.subr.bf16.mxu0 0
        %407 = vmatpush1.bf16.msra.mxu0 0
        %408 = vmatprep.subr.bf16.mxu0 0
        %409 = vmatpush1.bf16.msra.mxu0 0
        %410 = vmatprep.subr.bf16.mxu0 0
        %411 = vmatpush1.bf16.msra.mxu0 0
        %412 = vmatprep.subr.bf16.mxu0 0
        %413 = vmatpush1.bf16.msra.mxu0 0
        %414 = vmatprep.subr.bf16.mxu0 0
        %415 = vmatpush1.bf16.msra.mxu0 0
        %416 = vmatprep.subr.bf16.mxu0 0
        %417 = vmatpush1.bf16.msra.mxu0 0
        %418 = vmatprep.subr.bf16.mxu0 0
        %419 = vmatpush1.bf16.msra.mxu0 0
        %420 = vmatprep.mubr.bf16.mxu0 0
        %421 = vmatmul.mubr.bf16.gmra.mrb[0].mxu0 %v200
        %v422 = vpop.f32.mrb[0].mxu0
        %v423 = vadd.f32 %v383, %v422
        %v424 = vpop.f32.mrb[0].mxu0
        %v425 = vpop.f32.mrb[0].mxu0
        %v426 = vpop.f32.mrb[0].mxu0
        %427 = vdwg.mxu0
        %v428 = vmul.f32 %v423, 0.05103104
        %v429 = vpack.c.bf16 %v428, %v428
        %v430 = vpack.c.bf16 %v423, %v423
        %432 = vrot.lane.b32.xlu0 %v429, 96
        %v433 = vpop.permute.xlu0 %432
        %vm434 = vcmask 261120
        %v436 = vsel %vm434, %v433, 0
        %v439 = vsel %vm434, %v430, 0
        %441 = vmatprep.subr.bf16.mxu0 0
        %442 = vmatpush1.bf16.xpose.msra.mxu0 %v439
        %443 = vmatprep.subr.bf16.mxu0 0
        %444 = vmatpush1.bf16.xpose.msra.mxu0 0
        %445 = vmatprep.subr.bf16.mxu0 0
        %446 = vmatpush1.bf16.xpose.msra.mxu0 0
        %447 = vmatprep.subr.bf16.mxu0 0
        %448 = vmatpush1.bf16.xpose.msra.mxu0 0
        %449 = vmatprep.subr.bf16.mxu0 0
        %450 = vmatpush1.bf16.xpose.msra.mxu0 0
        %451 = vmatprep.subr.bf16.mxu0 0
        %452 = vmatpush1.bf16.xpose.msra.mxu0 0
        %453 = vmatprep.subr.bf16.mxu0 0
        %454 = vmatpush1.bf16.xpose.msra.mxu0 0
        %455 = vmatprep.subr.bf16.mxu0 0
        %456 = vmatpush1.bf16.xpose.msra.mxu0 0
        %457 = vmatprep.subr.bf16.mxu0 0
        %458 = vmatpush1.bf16.xpose.msra.mxu0 0
        %459 = vmatprep.subr.bf16.mxu0 0
        %460 = vmatpush1.bf16.xpose.msra.mxu0 0
        %461 = vmatprep.subr.bf16.mxu0 0
        %462 = vmatpush1.bf16.xpose.msra.mxu0 0
        %463 = vmatprep.subr.bf16.mxu0 0
        %464 = vmatpush1.bf16.xpose.msra.mxu0 0
        %465 = vmatprep.subr.bf16.mxu0 0
        %466 = vmatpush1.bf16.xpose.msra.mxu0 0
        %467 = vmatprep.subr.bf16.mxu0 0
        %468 = vmatpush1.bf16.xpose.msra.mxu0 0
        %469 = vmatprep.subr.bf16.mxu0 0
        %470 = vmatpush1.bf16.xpose.msra.mxu0 0
        %471 = vmatprep.subr.bf16.mxu0 0
        %472 = vmatpush1.bf16.xpose.msra.mxu0 0
        %473 = vmatprep.mubr.bf16.mxu0 0
        %474 = vmatmul.mubr.bf16.gmra.mrb[0].mxu0 %v436
        %v475 = vpop.f32.mrb[0].mxu0
        %v476 = vadd.f32 0.0, %v475
        %v477 = vpop.f32.mrb[0].mxu0
        %v478 = vpop.f32.mrb[0].mxu0
        %v479 = vpop.f32.mrb[0].mxu0
        %480 = vdwg.mxu0
        %v481 = vlaneseq
        %v482 = vshrl.u32 %v481, 7
        %v483 = vlaneseq
        %v484 = vand.u32 %v483, 127
        %vm485 = vcmp.le.s32.totalorder %v484, %v482
        %v486 = vsel %vm485, %v476, -inf
        %vm487 = vcmask 64512
        %v488 = vsel %vm487, %v486, -inf
        %489 = vmax.xlane.f32.xlu0 %v488
        %v490 = vpop.xlane.xlu0 %489
        %v491 = vsub.f32 %v486, %v490
        %v492 = vmul.f32 %v491, 1.442695
        %v493 = vpow.pop %v492
        %v494 = vsel %vm487, %v493, 0.0
        %495 = vadd.xlane.f32.xlu0 %v494
        %v496 = vpop.xlane.xlu0 %495
        %v497 = vpack.c.bf16 %v493, %v493
        %499 = vrot.lane.b32.xlu0 %v430, 64
        %v500 = vpop.permute.xlu0 %499
        %v502 = vsel %vm487, %v497, 0
        %vm504 = vcmask 1043456
        %v506 = vsel %vm504, %v500, 0
        %508 = vmatprep.subr.bf16.mxu0 0
        %509 = vmatpush1.bf16.msra.mxu0 %v506
        %510 = vmatprep.subr.bf16.mxu0 0
        %511 = vmatpush1.bf16.msra.mxu0 0
        %512 = vmatprep.subr.bf16.mxu0 0
        %513 = vmatpush1.bf16.msra.mxu0 0
        %514 = vmatprep.subr.bf16.mxu0 0
        %515 = vmatpush1.bf16.msra.mxu0 0
        %516 = vmatprep.subr.bf16.mxu0 0
        %517 = vmatpush1.bf16.msra.mxu0 0
        %518 = vmatprep.subr.bf16.mxu0 0
        %519 = vmatpush1.bf16.msra.mxu0 0
        %520 = vmatprep.subr.bf16.mxu0 0
        %521 = vmatpush1.bf16.msra.mxu0 0
        %522 = vmatprep.subr.bf16.mxu0 0
        %523 = vmatpush1.bf16.msra.mxu0 0
        %524 = vmatprep.subr.bf16.mxu0 0
        %525 = vmatpush1.bf16.msra.mxu0 0
        %526 = vmatprep.subr.bf16.mxu0 0
        %527 = vmatpush1.bf16.msra.mxu0 0
        %528 = vmatprep.subr.bf16.mxu0 0
        %529 = vmatpush1.bf16.msra.mxu0 0
        %530 = vmatprep.subr.bf16.mxu0 0
        %531 = vmatpush1.bf16.msra.mxu0 0
        %532 = vmatprep.subr.bf16.mxu0 0
        %533 = vmatpush1.bf16.msra.mxu0 0
        %534 = vmatprep.subr.bf16.mxu0 0
        %535 = vmatpush1.bf16.msra.mxu0 0
        %536 = vmatprep.subr.bf16.mxu0 0
        %537 = vmatpush1.bf16.msra.mxu0 0
        %538 = vmatprep.subr.bf16.mxu0 0
        %539 = vmatpush1.bf16.msra.mxu0 0
        %540 = vmatprep.mubr.bf16.mxu0 0
        %541 = vmatmul.mubr.bf16.gmra.mrb[0].mxu0 %v502
        %v542 = vpop.f32.mrb[0].mxu0
        %v543 = vadd.f32 0.0, %v542
        %v544 = vpop.f32.mrb[0].mxu0
        %v545 = vpop.f32.mrb[0].mxu0
        %v546 = vpop.f32.mrb[0].mxu0
        %547 = vdwg.mxu0
        %v548 = vrcp.pop %v496
        %v549 = vmul.f32 %v543, %v548
        %550 = vst.msk [vmem:[%s136] sm:$0xff] %vm434, %v549
        %s551 = sand.u32 %s71, 1
        %s552 = scalar_lea.sflag [#allocation3], %s551
        %s553 = sand.u32 %s71, 1
        %s554 = smul.addr %s553, 8
        %s555 = scalar_lea.vmem [#allocation2], %s554
        // Predicated region
        $region29: #{tpu_custom_call.1} parent=27 // pred_check
          %p556 = pneg %p81
        $region30: #{tpu_custom_call.1} parent=27 // pred_check_branch
          %558 = sbr.rel (%p556) target = $region32
        $region31: #{tpu_custom_call.1} parent=27 // pred_region
          %s560 = ssub.s32 128, 128
          %561 = vsyncadd %s552, %s560
          %s562 = smul.addr %s16, 128
          %s563 = scalar_lea.hbm %s2, %s562
          %s565 = sshll.u32 %s555, 4
          %s566 = int_to_ptr.vmem [resolvable:$true] %s565
          %568 = dma.vmem_to_hbm [thread:$0]  %s566, 128, %s563, %s552
        $region32: #{tpu_custom_call.1} parent=27 // pred_fallthru
          _
      $region28: #{tpu_custom_call.1} parent=5 // pred_fallthru
        _
      %p569 = scmp.le.s32.totalorder 2, %s11
      // Predicated region
      $region33: #{tpu_custom_call.1} parent=5 // pred_check
        %p570 = pneg %p569
      $region34: #{tpu_custom_call.1} parent=5 // pred_check_branch
        %572 = sbr.rel (%p570) target = $region36
      $region35: #{tpu_custom_call.1} parent=5 // pred_region
        %s573 = ssub.s32 %s11, 2
        // Predicated region
        $region37: #{tpu_custom_call.1} parent=35 // pred_check
          %p574 = pneg %p87
        $region38: #{tpu_custom_call.1} parent=35 // pred_check_branch
          %576 = sbr.rel (%p574) target = $region40
        $region39: #{tpu_custom_call.1} parent=35 // pred_region
          %s577 = sand.u32 %s72, 1
          %s578 = scalar_lea.sflag [#allocation3], %s577
          %s579 = sand.u32 %s72, 1
          %s580 = smul.addr %s579, 8
          %s581 = scalar_lea.vmem [#allocation2], %s580
          %582 = dma.done %s578, 128
        $region40: #{tpu_custom_call.1} parent=35 // pred_fallthru
          _
      $region36: #{tpu_custom_call.1} parent=5 // pred_fallthru
        _
    $region6: #{tpu_custom_call.1} parent=1 // loop_footer
      %s15 = sadd.s32 1, %s11
    $region7: #{tpu_custom_call.1} parent=1 // loop_footer_branch
      %10 = sbr.rel target = $region3
    $region8: #{tpu_custom_call.1} parent=1 // loop_exit
      _
    %583 = vsyncpa [#allocation3], 1
    %s584 = scalar_lea.sflag [#allocation3], 1
    %585 = vsyncpa %s584, 1

</llo_original>
